<compile_context>
chip_gen: v7x
topology: tpu7x:2x2x1
jax: 0.10.0
libtpu: 0.0.40
codegen_flags: <defaults>
</compile_context>

<pallas_src>
import functools

import jax
import jax.numpy as jnp
from jax.experimental import pallas as pl
from jax.experimental.pallas import tpu as pltpu

# ---------------------------------------------------------------------------
# Problem sizes (small, but lane-friendly: 4*HIDDEN = 128)
# ---------------------------------------------------------------------------
BATCH = 8
INPUT_SIZE = 16
HIDDEN = 32
OUTPUT_SIZE = 16
N_LAYERS = 2


# ---------------------------------------------------------------------------
# Pallas kernel: embed -> N_LAYERS x LSTMCell -> fused mu|logvar -> reparam
# ---------------------------------------------------------------------------
def gaussian_lstm_kernel(
    act_ref,      # [B, I + O + 2*L*H]   = [x | eps | h_flat | c_flat]
    wsmall_ref,   # [I + H, max(H, 2O)]  = [w_embed ; (w_mu|w_lv)]
    wcat_ref,     # [L, 2H, 4H]          = [W_ih ; W_hh] per layer (pre-transposed)
    bias_ref,     # [L + 1, 4H]          row0 = [b_embed | b_mu|b_lv | 0], rows 1..L = b_ih+b_hh
    out_ref,      # [B, 3*O + 2*L*H]     = [z | mu | logvar | h_flat | c_flat]
    *,
    input_size: int,
    output_size: int,
    hidden_size: int,
    n_layers: int,
):
    I, O, H, L = input_size, output_size, hidden_size, n_layers

    acts = act_ref[...]          # [B, I + O + 2*L*H]
    ws = wsmall_ref[...]         # [I + H, max(H, 2O)]
    biases = bias_ref[...]       # [L + 1, 4H]
    B = acts.shape[0]

    x = acts[:, :I]
    eps = acts[:, I:I + O]
    h_base = I + O
    c_base = I + O + L * H

    # ---- embedding linear --------------------------------------------------
    h_in = (
        jnp.dot(x, ws[:I, :H], preferred_element_type=jnp.float32)
        + biases[0:1, :H]
    )

    # tanh for the g-block lanes, sigmoid elsewhere (PyTorch order i|f|g|o)
    lane = jax.lax.broadcasted_iota(jnp.int32, (B, 4 * H), 1)
    g_mask = (lane >= 2 * H) & (lane < 3 * H)

    # ---- stacked LSTM cells (static unroll, one fused matmul per layer) ----
    h_news, c_news = [], []
    for layer in range(L):
        h_prev = acts[:, h_base + layer * H: h_base + (layer + 1) * H]
        c_prev = acts[:, c_base + layer * H: c_base + (layer + 1) * H]

        hh = jnp.concatenate([h_in, h_prev], axis=-1)                 # [B, 2H]
        gates = (
            jnp.dot(hh, wcat_ref[layer], preferred_element_type=jnp.float32)
            + biases[layer + 1: layer + 2, :]
        )                                                             # [B, 4H]

        # two full-vreg EUP passes + lane-select instead of 4 sliced activations
        act = jnp.where(g_mask, jnp.tanh(gates), jax.nn.sigmoid(gates))  # i|f|g|o
        rolled = pltpu.roll(act, shift=2 * H, axis=1)                    # g|o|i|f
        ig = (act * rolled)[:, :H]                                       # i * g
        f_g = act[:, H:2 * H]
        o_g = act[:, 3 * H:4 * H]

        c_new = f_g * c_prev + ig
        h_new = o_g * jnp.tanh(c_new)
        h_news.append(h_new)
        c_news.append(c_new)
        h_in = h_new

    # ---- fused mu|logvar head + reparameterization --------------------------
    ml = (
        jnp.dot(h_in, ws[I:I + H, :2 * O], preferred_element_type=jnp.float32)
        + biases[0:1, H:H + 2 * O]
    )                                                                 # [B, 2O]
    mu = ml[:, :O]
    logvar = ml[:, O:2 * O]
    z = eps * jnp.exp(0.5 * logvar) + mu

    # single lane-dense output write (1 writeback DMA)
    out_ref[...] = jnp.concatenate([z, mu, logvar] + h_news + c_news, axis=-1)


# ---------------------------------------------------------------------------
# Wrapper
# ---------------------------------------------------------------------------
def gaussian_lstm_forward(packed, x, hidden_h, hidden_c, eps):
    """Returns (z, mu, logvar), (new_h, new_c)."""
    B, I = x.shape
    L = packed["w_cat"].shape[0]
    H = packed["w_cat"].shape[2] // 4
    O = eps.shape[1]

    # pack activations into one lane-dense slab: [x | eps | h_flat | c_flat]
    h_flat = jnp.transpose(hidden_h, (1, 0, 2)).reshape(B, L * H)
    c_flat = jnp.transpose(hidden_c, (1, 0, 2)).reshape(B, L * H)
    act_slab = jnp.concatenate([x, eps, h_flat, c_flat], axis=-1)

    vmem_spec = pl.BlockSpec(memory_space=pltpu.MemorySpace.VMEM)
    kernel = functools.partial(
        gaussian_lstm_kernel,
        input_size=I, output_size=O, hidden_size=H, n_layers=L,
    )

    out_width = 3 * O + 2 * L * H
    out = pl.pallas_call(
        kernel,
        out_shape=jax.ShapeDtypeStruct((B, out_width), jnp.float32),
        in_specs=[vmem_spec] * 4,
        out_specs=vmem_spec,
    )(act_slab, packed["w_small"], packed["w_cat"], packed["bias"])

    z = out[:, 0:O]
    mu = out[:, O:2 * O]
    logvar = out[:, 2 * O:3 * O]
    h_new = out[:, 3 * O:3 * O + L * H].reshape(B, L, H).transpose(1, 0, 2)
    c_new = out[:, 3 * O + L * H:].reshape(B, L, H).transpose(1, 0, 2)
    return (z, mu, logvar), (h_new, c_new)


# ---------------------------------------------------------------------------
# Deterministic parameter init (mirrors module __init__ shapes)
# ---------------------------------------------------------------------------
def init_params(key):
    ks = jax.random.split(key, 10)
    scale = 1.0 / jnp.sqrt(jnp.float32(HIDDEN))

    def u(k, shape):
        return jax.random.uniform(k, shape, jnp.float32, -scale, scale)

    # nn.Linear(input_size, hidden_size)  -> stored transposed [I, H]
    w_embed = u(ks[0], (INPUT_SIZE, HIDDEN))
    b_embed = u(ks[1], (1, HIDDEN))

    # n_layers x nn.LSTMCell(hidden, hidden): torch weight_ih [4H, H] -> [L, H, 4H]
    w_ih = u(ks[2], (N_LAYERS, HIDDEN, 4 * HIDDEN))
    w_hh = u(ks[3], (N_LAYERS, HIDDEN, 4 * HIDDEN))
    b_ih = u(ks[4], (N_LAYERS, 1, 4 * HIDDEN))
    b_hh = u(ks[5], (N_LAYERS, 1, 4 * HIDDEN))
    b_gates = b_ih + b_hh

    # mu / logvar heads: nn.Linear(hidden, output) -> [H, O]
    w_mu = u(ks[6], (HIDDEN, OUTPUT_SIZE))
    b_mu = u(ks[7], (1, OUTPUT_SIZE))
    w_lv = u(ks[8], (HIDDEN, OUTPUT_SIZE))
    b_lv = u(ks[9], (1, OUTPUT_SIZE))

    return dict(
        w_embed=w_embed, b_embed=b_embed,
        w_ih=w_ih, w_hh=w_hh, b_gates=b_gates,
        w_mu=w_mu, b_mu=b_mu, w_lv=w_lv, b_lv=b_lv,
    )


def pack_params(params):
    """Pack logical params into the 3 fused weight/bias slabs the kernel uses."""
    L = params["w_ih"].shape[0]
    H = params["w_ih"].shape[1]
    I = params["w_embed"].shape[0]
    O = params["w_mu"].shape[1]
    assert H + 2 * O <= 4 * H, "bias slab row-0 layout requires 2*O <= 3*H"

    # fused recurrent weight: gates = [h_in | h_prev] @ w_cat[layer] + bias
    w_cat = jnp.concatenate([params["w_ih"], params["w_hh"]], axis=1)   # [L, 2H, 4H]

    # small-weights slab: rows [0:I) = w_embed, rows [I:I+H) = [w_mu | w_lv]
    cols = max(H, 2 * O)
    we = jnp.pad(params["w_embed"], ((0, 0), (0, cols - H)))
    wh = jnp.pad(jnp.concatenate([params["w_mu"], params["w_lv"]], axis=1),
                 ((0, 0), (0, cols - 2 * O)))
    w_small = jnp.concatenate([we, wh], axis=0)                         # [I+H, cols]

    # bias slab [L+1, 4H]: row0 = [b_embed | b_mu|b_lv | 0], rows 1..L = gate biases
    row0 = jnp.zeros((1, 4 * H), jnp.float32)
    row0 = row0.at[:, :H].set(params["b_embed"])
    row0 = row0.at[:, H:H + 2 * O].set(
        jnp.concatenate([params["b_mu"], params["b_lv"]], axis=1))
    bias = jnp.concatenate([row0, params["b_gates"].reshape(L, 4 * H)], axis=0)

    return dict(w_cat=w_cat, w_small=w_small, bias=bias)


# ---------------------------------------------------------------------------
# Pure-JAX reference for a sanity check
# ---------------------------------------------------------------------------
def reference_forward(params, x, h, c, eps):
    h_in = x @ params["w_embed"] + params["b_embed"]
    H = HIDDEN
    new_h, new_c = [], []
    for l in range(N_LAYERS):
        gates = h_in @ params["w_ih"][l] + h[l] @ params["w_hh"][l] + params["b_gates"][l]
        i_g = jax.nn.sigmoid(gates[:, 0:H])
        f_g = jax.nn.sigmoid(gates[:, H:2 * H])
        g_g = jnp.tanh(gates[:, 2 * H:3 * H])
        o_g = jax.nn.sigmoid(gates[:, 3 * H:4 * H])
        c_new = f_g * c[l] + i_g * g_g
        h_new = o_g * jnp.tanh(c_new)
        new_h.append(h_new)
        new_c.append(c_new)
        h_in = h_new
    mu = h_in @ params["w_mu"] + params["b_mu"]
    logvar = h_in @ params["w_lv"] + params["b_lv"]
    z = eps * jnp.exp(0.5 * logvar) + mu
    return z, mu, logvar, jnp.stack(new_h), jnp.stack(new_c)


# ---------------------------------------------------------------------------
if __name__ == "__main__":
    key = jax.random.PRNGKey(0)
    k_param, k_x, k_eps, k_h, k_c = jax.random.split(key, 5)

    params = init_params(k_param)
    packed = pack_params(params)

    x = jax.random.normal(k_x, (BATCH, INPUT_SIZE), jnp.float32)
    eps = jax.random.normal(k_eps, (BATCH, OUTPUT_SIZE), jnp.float32)

    # test both the module's init_hidden() (zeros) and a nonzero recurrent state
    hidden_cases = [
        (jnp.zeros((N_LAYERS, BATCH, HIDDEN), jnp.float32),
         jnp.zeros((N_LAYERS, BATCH, HIDDEN), jnp.float32)),
        (0.5 * jax.random.normal(k_h, (N_LAYERS, BATCH, HIDDEN), jnp.float32),
         0.5 * jax.random.normal(k_c, (N_LAYERS, BATCH, HIDDEN), jnp.float32)),
    ]

    for h0, c0 in hidden_cases:
        (z, mu, logvar), (h_new, c_new) = gaussian_lstm_forward(packed, x, h0, c0, eps)
        jax.block_until_ready((z, mu, logvar, h_new, c_new))

        z_r, mu_r, lv_r, h_r, c_r = reference_forward(params, x, h0, c0, eps)
        assert jnp.allclose(z, z_r, atol=1e-5), "z mismatch"
        assert jnp.allclose(mu, mu_r, atol=1e-5), "mu mismatch"
        assert jnp.allclose(logvar, lv_r, atol=1e-5), "logvar mismatch"
        assert jnp.allclose(h_new, h_r, atol=1e-5), "hidden h mismatch"
        assert jnp.allclose(c_new, c_r, atol=1e-5), "hidden c mismatch"

    print("KERNEL_OK")
</pallas_src>

<mosaic_0001>
module attributes {stable_mosaic.version = 11 : i64} {
  func.func @gaussian_lstm_kernel(%arg0: memref<8x160xf32, #tpu.memory_space<vmem>>, %arg1: memref<48x32xf32, #tpu.memory_space<vmem>>, %arg2: memref<2x64x128xf32, #tpu.memory_space<vmem>>, %arg3: memref<3x128xf32, #tpu.memory_space<vmem>>, %arg4: memref<8x176xf32, #tpu.memory_space<vmem>>) attributes {dimension_semantics = [], scalar_prefetch = 0 : i64, scratch_operands = 0 : i64, tpu.core_type = #tpu.core_type<tc>} {
    %c0 = arith.constant 0 : index
    %c0_0 = arith.constant 0 : index
    %0 = vector.load %arg0[%c0, %c0_0] : memref<8x160xf32, #tpu.memory_space<vmem>>, vector<8x160xf32>
    %c0_1 = arith.constant 0 : index
    %c0_2 = arith.constant 0 : index
    %1 = vector.load %arg1[%c0_1, %c0_2] : memref<48x32xf32, #tpu.memory_space<vmem>>, vector<48x32xf32>
    %c0_3 = arith.constant 0 : index
    %c0_4 = arith.constant 0 : index
    %2 = vector.load %arg3[%c0_3, %c0_4] : memref<3x128xf32, #tpu.memory_space<vmem>>, vector<3x128xf32>
    %3 = vector.extract_strided_slice %0 {offsets = [0, 0], sizes = [8, 16], strides = [1, 1]} : vector<8x160xf32> to vector<8x16xf32>
    %4 = vector.extract_strided_slice %0 {offsets = [0, 16], sizes = [8, 16], strides = [1, 1]} : vector<8x160xf32> to vector<8x16xf32>
    %5 = vector.extract_strided_slice %1 {offsets = [0, 0], sizes = [16, 32], strides = [1, 1]} : vector<48x32xf32> to vector<16x32xf32>
    %cst = arith.constant dense<0.000000e+00> : vector<8x32xf32>
    %6 = tpu.matmul %3, %5, %cst {dimension_numbers = #tpu.dot_dimension_numbers<[1], [0], [0], [1], [0, 0, 1, 1], [], []>} : vector<8x16xf32>, vector<16x32xf32>, vector<8x32xf32> -> vector<8x32xf32>
    %7 = vector.extract_strided_slice %2 {offsets = [0, 0], sizes = [1, 32], strides = [1, 1]} : vector<3x128xf32> to vector<1x32xf32>
    %8 = vector.broadcast %7 : vector<1x32xf32> to vector<8x32xf32>
    %9 = arith.addf %6, %8 : vector<8x32xf32>
    %10 = tpu.iota {dimensions = array<i32: 1>} : vector<8x128xi32>
    %c64_i32 = arith.constant 64 : i32
    %11 = vector.broadcast %c64_i32 : i32 to vector<8x128xi32>
    %12 = arith.cmpi sge, %10, %11 : vector<8x128xi32>
    %c96_i32 = arith.constant 96 : i32
    %13 = vector.broadcast %c96_i32 : i32 to vector<8x128xi32>
    %14 = arith.cmpi slt, %10, %13 : vector<8x128xi32>
    %15 = arith.andi %12, %14 : vector<8x128xi1>
    %16 = vector.extract_strided_slice %0 {offsets = [0, 32], sizes = [8, 32], strides = [1, 1]} : vector<8x160xf32> to vector<8x32xf32>
    %17 = vector.extract_strided_slice %0 {offsets = [0, 96], sizes = [8, 32], strides = [1, 1]} : vector<8x160xf32> to vector<8x32xf32>
    %18 = tpu.concatenate %9, %16 in 1 : vector<8x32xf32>, vector<8x32xf32> -> vector<8x64xf32>
    %c0_5 = arith.constant 0 : index
    %c0_6 = arith.constant 0 : index
    %c0_7 = arith.constant 0 : index
    %19 = vector.load %arg2[%c0_5, %c0_6, %c0_7] : memref<2x64x128xf32, #tpu.memory_space<vmem>>, vector<1x64x128xf32>
    %20 = vector.shape_cast %19 : vector<1x64x128xf32> to vector<64x128xf32>
    %cst_8 = arith.constant dense<0.000000e+00> : vector<8x128xf32>
    %21 = tpu.matmul %18, %20, %cst_8 {dimension_numbers = #tpu.dot_dimension_numbers<[1], [0], [0], [1], [0, 0, 1, 1], [], []>} : vector<8x64xf32>, vector<64x128xf32>, vector<8x128xf32> -> vector<8x128xf32>
    %22 = vector.extract_strided_slice %2 {offsets = [1, 0], sizes = [1, 128], strides = [1, 1]} : vector<3x128xf32> to vector<1x128xf32>
    %23 = vector.broadcast %22 : vector<1x128xf32> to vector<8x128xf32>
    %24 = arith.addf %21, %23 : vector<8x128xf32>
    %25 = math.tanh %24 : vector<8x128xf32>
    %26 = arith.negf %24 : vector<8x128xf32>
    %27 = math.exp %26 : vector<8x128xf32>
    %cst_9 = arith.constant 1.000000e+00 : f32
    %28 = vector.broadcast %cst_9 : f32 to vector<8x128xf32>
    %29 = arith.addf %28, %27 : vector<8x128xf32>
    %30 = arith.divf %28, %29 : vector<8x128xf32>
    %31 = arith.select %15, %25, %30 : vector<8x128xi1>, vector<8x128xf32>
    %c64_i32_10 = arith.constant 64 : i32
    %32 = tpu.dynamic_rotate %31 by %c64_i32_10 dim 1 : vector<8x128xf32>, i32 -> vector<8x128xf32>
    %33 = arith.mulf %31, %32 : vector<8x128xf32>
    %34 = vector.extract_strided_slice %33 {offsets = [0, 0], sizes = [8, 32], strides = [1, 1]} : vector<8x128xf32> to vector<8x32xf32>
    %35 = vector.extract_strided_slice %31 {offsets = [0, 32], sizes = [8, 32], strides = [1, 1]} : vector<8x128xf32> to vector<8x32xf32>
    %36 = vector.extract_strided_slice %31 {offsets = [0, 96], sizes = [8, 32], strides = [1, 1]} : vector<8x128xf32> to vector<8x32xf32>
    %37 = arith.mulf %35, %17 : vector<8x32xf32>
    %38 = arith.addf %37, %34 : vector<8x32xf32>
    %39 = math.tanh %38 : vector<8x32xf32>
    %40 = arith.mulf %36, %39 : vector<8x32xf32>
    %41 = vector.extract_strided_slice %0 {offsets = [0, 64], sizes = [8, 32], strides = [1, 1]} : vector<8x160xf32> to vector<8x32xf32>
    %42 = vector.extract_strided_slice %0 {offsets = [0, 128], sizes = [8, 32], strides = [1, 1]} : vector<8x160xf32> to vector<8x32xf32>
    %43 = tpu.concatenate %40, %41 in 1 : vector<8x32xf32>, vector<8x32xf32> -> vector<8x64xf32>
    %c1 = arith.constant 1 : index
    %c0_11 = arith.constant 0 : index
    %c0_12 = arith.constant 0 : index
    %44 = vector.load %arg2[%c1, %c0_11, %c0_12] : memref<2x64x128xf32, #tpu.memory_space<vmem>>, vector<1x64x128xf32>
    %45 = vector.shape_cast %44 : vector<1x64x128xf32> to vector<64x128xf32>
    %cst_13 = arith.constant dense<0.000000e+00> : vector<8x128xf32>
    %46 = tpu.matmul %43, %45, %cst_13 {dimension_numbers = #tpu.dot_dimension_numbers<[1], [0], [0], [1], [0, 0, 1, 1], [], []>} : vector<8x64xf32>, vector<64x128xf32>, vector<8x128xf32> -> vector<8x128xf32>
    %47 = vector.extract_strided_slice %2 {offsets = [2, 0], sizes = [1, 128], strides = [1, 1]} : vector<3x128xf32> to vector<1x128xf32>
    %48 = vector.broadcast %47 : vector<1x128xf32> to vector<8x128xf32>
    %49 = arith.addf %46, %48 : vector<8x128xf32>
    %50 = math.tanh %49 : vector<8x128xf32>
    %51 = arith.negf %49 : vector<8x128xf32>
    %52 = math.exp %51 : vector<8x128xf32>
    %cst_14 = arith.constant 1.000000e+00 : f32
    %53 = vector.broadcast %cst_14 : f32 to vector<8x128xf32>
    %54 = arith.addf %53, %52 : vector<8x128xf32>
    %55 = arith.divf %53, %54 : vector<8x128xf32>
    %56 = arith.select %15, %50, %55 : vector<8x128xi1>, vector<8x128xf32>
    %c64_i32_15 = arith.constant 64 : i32
    %57 = tpu.dynamic_rotate %56 by %c64_i32_15 dim 1 : vector<8x128xf32>, i32 -> vector<8x128xf32>
    %58 = arith.mulf %56, %57 : vector<8x128xf32>
    %59 = vector.extract_strided_slice %58 {offsets = [0, 0], sizes = [8, 32], strides = [1, 1]} : vector<8x128xf32> to vector<8x32xf32>
    %60 = vector.extract_strided_slice %56 {offsets = [0, 32], sizes = [8, 32], strides = [1, 1]} : vector<8x128xf32> to vector<8x32xf32>
    %61 = vector.extract_strided_slice %56 {offsets = [0, 96], sizes = [8, 32], strides = [1, 1]} : vector<8x128xf32> to vector<8x32xf32>
    %62 = arith.mulf %60, %42 : vector<8x32xf32>
    %63 = arith.addf %62, %59 : vector<8x32xf32>
    %64 = math.tanh %63 : vector<8x32xf32>
    %65 = arith.mulf %61, %64 : vector<8x32xf32>
    %66 = vector.extract_strided_slice %1 {offsets = [16, 0], sizes = [32, 32], strides = [1, 1]} : vector<48x32xf32> to vector<32x32xf32>
    %cst_16 = arith.constant dense<0.000000e+00> : vector<8x32xf32>
    %67 = tpu.matmul %65, %66, %cst_16 {dimension_numbers = #tpu.dot_dimension_numbers<[1], [0], [0], [1], [0, 0, 1, 1], [], []>} : vector<8x32xf32>, vector<32x32xf32>, vector<8x32xf32> -> vector<8x32xf32>
    %68 = vector.extract_strided_slice %2 {offsets = [0, 32], sizes = [1, 32], strides = [1, 1]} : vector<3x128xf32> to vector<1x32xf32>
    %69 = vector.broadcast %68 : vector<1x32xf32> to vector<8x32xf32>
    %70 = arith.addf %67, %69 : vector<8x32xf32>
    %71 = vector.extract_strided_slice %70 {offsets = [0, 0], sizes = [8, 16], strides = [1, 1]} : vector<8x32xf32> to vector<8x16xf32>
    %72 = vector.extract_strided_slice %70 {offsets = [0, 16], sizes = [8, 16], strides = [1, 1]} : vector<8x32xf32> to vector<8x16xf32>
    %cst_17 = arith.constant 5.000000e-01 : f32
    %73 = vector.broadcast %cst_17 : f32 to vector<8x16xf32>
    %74 = arith.mulf %73, %72 : vector<8x16xf32>
    %75 = math.exp %74 : vector<8x16xf32>
    %76 = arith.mulf %4, %75 : vector<8x16xf32>
    %77 = arith.addf %76, %71 : vector<8x16xf32>
    %78 = tpu.concatenate %77, %71, %72, %40, %65, %38, %63 in 1 : vector<8x16xf32>, vector<8x16xf32>, vector<8x16xf32>, vector<8x32xf32>, vector<8x32xf32>, vector<8x32xf32>, vector<8x32xf32> -> vector<8x176xf32>
    %c0_18 = arith.constant 0 : index
    %c0_19 = arith.constant 0 : index
    %79 = vector.load %arg4[%c0_18, %c0_19] : memref<8x176xf32, #tpu.memory_space<vmem>>, vector<8x176xf32>
    tpu.vector_store %arg4[%c0_18, %c0_19], %78 {strides = array<i32>} : memref<8x176xf32, #tpu.memory_space<vmem>>, vector<8x176xf32>,
    return
  }
}

</mosaic_0001>

<llo_original>
// kernel: tpu_custom_call.1
$region0: #{tpu_custom_call.1}
  #allocation0 [shape = 'u32[]', space=smem, size = 0x4, offset = 0x4, fixed_abs, tag = 'smem constant byte address 0x4 - core index']
  #allocation1 [shape = 'u32[144,128]{1,0:T(1,128)}', space=vmem, size = 0x12000, scoped, tag = 'internal scratch']
  %s0 = inlined_call_operand.vmem [shape: f32[8,160], index: 0, kind: input, shape index: {}]
  %s1 = inlined_call_operand.vmem [shape: f32[48,32], index: 1, kind: input, shape index: {}]
  %s2 = inlined_call_operand.hbm [shape: f32[2,64,128], index: 2, kind: input, shape index: {}]
  %s3 = inlined_call_operand.vmem [shape: f32[3,128], index: 3, kind: input, shape index: {}]
  %s4 = inlined_call_operand.hbm [shape: f32[8,176], index: 4, kind: output, shape index: {}]
  %s5 = sld [smem:[#allocation0]]
  $region30: #{tpu_custom_call.1} parent=0
    _
  %s7 = ssub.s32 1, %s5
  %s8 = scalar_select 0, %s7, %s5
  $region1: #{tpu_custom_call.1} parent=0
    #allocation2 [shape = 'u8[65536]{0}', space=vmem, size = 0x10000, scoped, tag = 'input window, operand 2, single buffered']
    #allocation3 [shape = 's32[1]{0}', space=sflag, size = 0x4, scoped, tag = 'scoped memory for tpu_custom_call.1']
    #allocation4 [shape = 's32[1]{0}', space=sflag, size = 0x4, scoped, tag = 'scoped memory for tpu_custom_call.1']
    #allocation5 [shape = 'u8[8192]{0}', space=vmem, size = 0x2000, scoped, tag = 'output window, operand 0, single buffered']
    %9 = vsyncpa [#allocation3], 0
    %10 = vsyncpa [#allocation4], 0
    // Predicated region
    $region2: #{tpu_custom_call.1} parent=1 // pred_check
      _
    $region3: #{tpu_custom_call.1} parent=1 // pred_check_branch
      %12 = sbr.rel (0) target = $region5
    $region4: #{tpu_custom_call.1} parent=1 // pred_region
      _
    $region5: #{tpu_custom_call.1} parent=1 // pred_fallthru
      _
    // Predicated region
    $region6: #{tpu_custom_call.1} parent=1 // pred_check
      _
    $region7: #{tpu_custom_call.1} parent=1 // pred_check_branch
      %14 = sbr.rel (0) target = $region9
    $region8: #{tpu_custom_call.1} parent=1 // pred_region
      _
    $region9: #{tpu_custom_call.1} parent=1 // pred_fallthru
      _
    // Predicated region
    $region10: #{tpu_custom_call.1} parent=1 // pred_check
      _
    $region11: #{tpu_custom_call.1} parent=1 // pred_check_branch
      %16 = sbr.rel (0) target = $region13
    $region12: #{tpu_custom_call.1} parent=1 // pred_region
      %s18 = ssub.s32 2048, 2048
      %19 = vsyncadd [#allocation3], %s18
      %s20 = sshll.u32 [#allocation2], 4
      %s21 = int_to_ptr.vmem [resolvable:$true] %s20
      %26 = dma.hbm_to_vmem [thread:$0]  %s2, 2048, %s21, [#allocation3], 128, 128, 8
    $region13: #{tpu_custom_call.1} parent=1 // pred_fallthru
      _
    // Predicated region
    $region14: #{tpu_custom_call.1} parent=1 // pred_check
      _
    $region15: #{tpu_custom_call.1} parent=1 // pred_check_branch
      %28 = sbr.rel (0) target = $region17
    $region16: #{tpu_custom_call.1} parent=1 // pred_region
      _
    $region17: #{tpu_custom_call.1} parent=1 // pred_fallthru
      _
    // Predicated region
    $region18: #{tpu_custom_call.1} parent=1 // pred_check
      _
    $region19: #{tpu_custom_call.1} parent=1 // pred_check_branch
      %30 = sbr.rel (0) target = $region21
    $region20: #{tpu_custom_call.1} parent=1 // pred_region
      %31 = dma.done [#allocation3], 2048
    $region21: #{tpu_custom_call.1} parent=1 // pred_fallthru
      _
    %v32 = vld [vmem:[%s0] sm:$0xff]
    %v33 = vld [vmem:[%s0 + $0x8] sm:$0xff]
    %v34 = vld [vmem:[%s1] sm:$0xff]
    %v35 = vld [vmem:[%s1 + $0x8] sm:$0xff]
    %v36 = vld [vmem:[%s1 + $0x10] sm:$0xff]
    %v37 = vld [vmem:[%s1 + $0x18] sm:$0xff]
    %v38 = vld [vmem:[%s1 + $0x20] sm:$0xff]
    %v39 = vld [vmem:[%s1 + $0x28] sm:$0xff]
    %v40 = vld [vmem:[%s3] sm:$0x7]
    %v41 = vlaneseq
    %v42 = vshrl.u32 %v41, 7
    %v43 = vsub.s32 0, %v42
    %v44 = vrot.slane %v40, %v43
    %vm45 = vcmask 130048
    %v47 = vsel %vm45, %v32, 0
    %49 = vmatprep.subr.mxu0 0.0
    %50 = vmatpush1.msra.mxu0 %v34
    %51 = vmatprep.subr.mxu0 0.0
    %52 = vmatpush1.msra.mxu0 %v35
    %53 = vmatprep.subr.mxu0 0.0
    %54 = vmatpush1.msra.mxu0 0.0
    %55 = vmatprep.subr.mxu0 0.0
    %56 = vmatpush1.msra.mxu0 0.0
    %57 = vmatprep.subr.mxu0 0.0
    %58 = vmatpush1.msra.mxu0 0.0
    %59 = vmatprep.subr.mxu0 0.0
    %60 = vmatpush1.msra.mxu0 0.0
    %61 = vmatprep.subr.mxu0 0.0
    %62 = vmatpush1.msra.mxu0 0.0
    %63 = vmatprep.subr.mxu0 0.0
    %64 = vmatpush1.msra.mxu0 0.0
    %65 = vmatprep.subr.mxu0 0.0
    %66 = vmatpush1.msra.mxu0 0.0
    %67 = vmatprep.subr.mxu0 0.0
    %68 = vmatpush1.msra.mxu0 0.0
    %69 = vmatprep.subr.mxu0 0.0
    %70 = vmatpush1.msra.mxu0 0.0
    %71 = vmatprep.subr.mxu0 0.0
    %72 = vmatpush1.msra.mxu0 0.0
    %73 = vmatprep.subr.mxu0 0.0
    %74 = vmatpush1.msra.mxu0 0.0
    %75 = vmatprep.subr.mxu0 0.0
    %76 = vmatpush1.msra.mxu0 0.0
    %77 = vmatprep.subr.mxu0 0.0
    %78 = vmatpush1.msra.mxu0 0.0
    %79 = vmatprep.subr.mxu0 0.0
    %80 = vmatpush1.msra.mxu0 0.0
    %81 = vmatprep.subr.mxu0 0.0
    %82 = vmatpush1.msra.mxu0 0.0
    %83 = vmatprep.subr.mxu0 0.0
    %84 = vmatpush1.msra.mxu0 0.0
    %85 = vmatprep.subr.mxu0 0.0
    %86 = vmatpush1.msra.mxu0 0.0
    %87 = vmatprep.subr.mxu0 0.0
    %88 = vmatpush1.msra.mxu0 0.0
    %89 = vmatprep.subr.mxu0 0.0
    %90 = vmatpush1.msra.mxu0 0.0
    %91 = vmatprep.subr.mxu0 0.0
    %92 = vmatpush1.msra.mxu0 0.0
    %93 = vmatprep.subr.mxu0 0.0
    %94 = vmatpush1.msra.mxu0 0.0
    %95 = vmatprep.subr.mxu0 0.0
    %96 = vmatpush1.msra.mxu0 0.0
    %97 = vmatprep.subr.mxu0 0.0
    %98 = vmatpush1.msra.mxu0 0.0
    %99 = vmatprep.subr.mxu0 0.0
    %100 = vmatpush1.msra.mxu0 0.0
    %101 = vmatprep.subr.mxu0 0.0
    %102 = vmatpush1.msra.mxu0 0.0
    %103 = vmatprep.subr.mxu0 0.0
    %104 = vmatpush1.msra.mxu0 0.0
    %105 = vmatprep.subr.mxu0 0.0
    %106 = vmatpush1.msra.mxu0 0.0
    %107 = vmatprep.subr.mxu0 0.0
    %108 = vmatpush1.msra.mxu0 0.0
    %109 = vmatprep.subr.mxu0 0.0
    %110 = vmatpush1.msra.mxu0 0.0
    %111 = vmatprep.subr.mxu0 0.0
    %112 = vmatpush1.msra.mxu0 0.0
    %113 = vmatprep.mubr.f32.mxu0 0.0
    %114 = vmatmul.mubr.f32.gmra.mrb[0].mxu0 %v47
    %v115 = vpop.f32.mrb[0].mxu0
    %v116 = vadd.f32 %v44, %v115
    %v117 = vpop.f32.mrb[0].mxu0
    %118 = vdwg.mxu0
    %v119 = vlaneseq
    %v120 = vand.u32 %v119, 127
    %vm121 = vcmp.ge.s32.totalorder %v120, 64
    %vm122 = vcmp.lt.s32.totalorder %v120, 96
    %vm123 = vmand %vm121, %vm122
    %vm124 = vcmask 261120
    %v125 = vsel %vm124, %v116, %v32
    %v126 = vld [vmem:[#allocation2] sm:$0xff]
    %v127 = vld [vmem:[#allocation2 + $0x8] sm:$0xff]
    %v128 = vld [vmem:[#allocation2 + $0x10] sm:$0xff]
    %v129 = vld [vmem:[#allocation2 + $0x18] sm:$0xff]
    %v130 = vld [vmem:[#allocation2 + $0x20] sm:$0xff]
    %v131 = vld [vmem:[#allocation2 + $0x28] sm:$0xff]
    %v132 = vld [vmem:[#allocation2 + $0x30] sm:$0xff]
    %v133 = vld [vmem:[#allocation2 + $0x38] sm:$0xff]
    %v134 = vlaneseq
    %v135 = vshrl.u32 %v134, 7
    %v136 = vsub.s32 1, %v135
    %v137 = vrot.slane %v40, %v136
    %vm138 = vcmask 523264
    %v140 = vsel %vm138, %v125, 0
    %142 = vmatprep.subr.mxu0 0.0
    %143 = vmatpush1.msra.mxu0 %v126
    %144 = vmatprep.subr.mxu0 0.0
    %145 = vmatpush1.msra.mxu0 %v127
    %146 = vmatprep.subr.mxu0 0.0
    %147 = vmatpush1.msra.mxu0 %v128
    %148 = vmatprep.subr.mxu0 0.0
    %149 = vmatpush1.msra.mxu0 %v129
    %150 = vmatprep.subr.mxu0 0.0
    %151 = vmatpush1.msra.mxu0 %v130
    %152 = vmatprep.subr.mxu0 0.0
    %153 = vmatpush1.msra.mxu0 %v131
    %154 = vmatprep.subr.mxu0 0.0
    %155 = vmatpush1.msra.mxu0 %v132
    %156 = vmatprep.subr.mxu0 0.0
    %157 = vmatpush1.msra.mxu0 %v133
    %158 = vmatprep.subr.mxu0 0.0
    %159 = vmatpush1.msra.mxu0 0.0
    %160 = vmatprep.subr.mxu0 0.0
    %161 = vmatpush1.msra.mxu0 0.0
    %162 = vmatprep.subr.mxu0 0.0
    %163 = vmatpush1.msra.mxu0 0.0
    %164 = vmatprep.subr.mxu0 0.0
    %165 = vmatpush1.msra.mxu0 0.0
    %166 = vmatprep.subr.mxu0 0.0
    %167 = vmatpush1.msra.mxu0 0.0
    %168 = vmatprep.subr.mxu0 0.0
    %169 = vmatpush1.msra.mxu0 0.0
    %170 = vmatprep.subr.mxu0 0.0
    %171 = vmatpush1.msra.mxu0 0.0
    %172 = vmatprep.subr.mxu0 0.0
    %173 = vmatpush1.msra.mxu0 0.0
    %174 = vmatprep.subr.mxu0 0.0
    %175 = vmatpush1.msra.mxu0 0.0
    %176 = vmatprep.subr.mxu0 0.0
    %177 = vmatpush1.msra.mxu0 0.0
    %178 = vmatprep.subr.mxu0 0.0
    %179 = vmatpush1.msra.mxu0 0.0
    %180 = vmatprep.subr.mxu0 0.0
    %181 = vmatpush1.msra.mxu0 0.0
    %182 = vmatprep.subr.mxu0 0.0
    %183 = vmatpush1.msra.mxu0 0.0
    %184 = vmatprep.subr.mxu0 0.0
    %185 = vmatpush1.msra.mxu0 0.0
    %186 = vmatprep.subr.mxu0 0.0
    %187 = vmatpush1.msra.mxu0 0.0
    %188 = vmatprep.subr.mxu0 0.0
    %189 = vmatpush1.msra.mxu0 0.0
    %190 = vmatprep.subr.mxu0 0.0
    %191 = vmatpush1.msra.mxu0 0.0
    %192 = vmatprep.subr.mxu0 0.0
    %193 = vmatpush1.msra.mxu0 0.0
    %194 = vmatprep.subr.mxu0 0.0
    %195 = vmatpush1.msra.mxu0 0.0
    %196 = vmatprep.subr.mxu0 0.0
    %197 = vmatpush1.msra.mxu0 0.0
    %198 = vmatprep.subr.mxu0 0.0
    %199 = vmatpush1.msra.mxu0 0.0
    %200 = vmatprep.subr.mxu0 0.0
    %201 = vmatpush1.msra.mxu0 0.0
    %202 = vmatprep.subr.mxu0 0.0
    %203 = vmatpush1.msra.mxu0 0.0
    %204 = vmatprep.subr.mxu0 0.0
    %205 = vmatpush1.msra.mxu0 0.0
    %206 = vmatprep.mubr.f32.mxu0 0.0
    %207 = vmatmul.mubr.f32.gmra.mrb[0].mxu0 %v140
    %v208 = vpop.f32.mrb[0].mxu0
    %v209 = vadd.f32 %v137, %v208
    %v210 = vpop.f32.mrb[0].mxu0
    %211 = vdwg.mxu0
    %v212 = vtanh.pop %v209
    %v213 = vxor.u32 %v209, 2147483648
    %v214 = vmul.f32 %v213, 1.442695
    %v215 = vpow.pop %v214
    %v216 = vadd.f32 %v215, 1.0
    %v217 = vrcp.pop %v216
    %v218 = vmul.f32 1.0, %v217
    %v219 = vsel %vm123, %v212, %v218
    %220 = vrot.lane.b32.xlu0 %v219, 64
    %v221 = vpop.permute.xlu0 %220
    %v222 = vmul.f32 %v219, %v221
    %223 = vrot.lane.b32.xlu0 %v32, 64
    %v224 = vpop.permute.xlu0 %223
    %v226 = vmul.f32 %v219, %v224
    %228 = vrot.lane.b32.xlu0 %v222, 32
    %v229 = vpop.permute.xlu0 %228
    %v231 = vadd.f32 %v226, %v229
    %v232 = vtanh.pop %v231
    %234 = vrot.lane.b32.xlu0 %v232, 64
    %v235 = vpop.permute.xlu0 %234
    %v237 = vmul.f32 %v219, %v235
    %239 = vrot.lane.b32.xlu0 %v237, 32
    %v240 = vpop.permute.xlu0 %239
    %242 = vrot.lane.b32.xlu0 %v32, 96
    %v243 = vpop.permute.xlu0 %242
    %v245 = vsel %vm124, %v240, %v243
    %s246 = scalar_lea.vmem [#allocation2], 64
    %v247 = vld [vmem:[%s246] sm:$0xff]
    %v248 = vld [vmem:[%s246 + $0x8] sm:$0xff]
    %v249 = vld [vmem:[%s246 + $0x10] sm:$0xff]
    %v250 = vld [vmem:[%s246 + $0x18] sm:$0xff]
    %v251 = vld [vmem:[%s246 + $0x20] sm:$0xff]
    %v252 = vld [vmem:[%s246 + $0x28] sm:$0xff]
    %v253 = vld [vmem:[%s246 + $0x30] sm:$0xff]
    %v254 = vld [vmem:[%s246 + $0x38] sm:$0xff]
    %v255 = vlaneseq
    %v256 = vshrl.u32 %v255, 7
    %v257 = vsub.s32 2, %v256
    %v258 = vrot.slane %v40, %v257
    %v260 = vsel %vm138, %v245, 0
    %262 = vmatprep.subr.mxu0 0.0
    %263 = vmatpush1.msra.mxu0 %v247
    %264 = vmatprep.subr.mxu0 0.0
    %265 = vmatpush1.msra.mxu0 %v248
    %266 = vmatprep.subr.mxu0 0.0
    %267 = vmatpush1.msra.mxu0 %v249
    %268 = vmatprep.subr.mxu0 0.0
    %269 = vmatpush1.msra.mxu0 %v250
    %270 = vmatprep.subr.mxu0 0.0
    %271 = vmatpush1.msra.mxu0 %v251
    %272 = vmatprep.subr.mxu0 0.0
    %273 = vmatpush1.msra.mxu0 %v252
    %274 = vmatprep.subr.mxu0 0.0
    %275 = vmatpush1.msra.mxu0 %v253
    %276 = vmatprep.subr.mxu0 0.0
    %277 = vmatpush1.msra.mxu0 %v254
    %278 = vmatprep.subr.mxu0 0.0
    %279 = vmatpush1.msra.mxu0 0.0
    %280 = vmatprep.subr.mxu0 0.0
    %281 = vmatpush1.msra.mxu0 0.0
    %282 = vmatprep.subr.mxu0 0.0
    %283 = vmatpush1.msra.mxu0 0.0
    %284 = vmatprep.subr.mxu0 0.0
    %285 = vmatpush1.msra.mxu0 0.0
    %286 = vmatprep.subr.mxu0 0.0
    %287 = vmatpush1.msra.mxu0 0.0
    %288 = vmatprep.subr.mxu0 0.0
    %289 = vmatpush1.msra.mxu0 0.0
    %290 = vmatprep.subr.mxu0 0.0
    %291 = vmatpush1.msra.mxu0 0.0
    %292 = vmatprep.subr.mxu0 0.0
    %293 = vmatpush1.msra.mxu0 0.0
    %294 = vmatprep.subr.mxu0 0.0
    %295 = vmatpush1.msra.mxu0 0.0
    %296 = vmatprep.subr.mxu0 0.0
    %297 = vmatpush1.msra.mxu0 0.0
    %298 = vmatprep.subr.mxu0 0.0
    %299 = vmatpush1.msra.mxu0 0.0
    %300 = vmatprep.subr.mxu0 0.0
    %301 = vmatpush1.msra.mxu0 0.0
    %302 = vmatprep.subr.mxu0 0.0
    %303 = vmatpush1.msra.mxu0 0.0
    %304 = vmatprep.subr.mxu0 0.0
    %305 = vmatpush1.msra.mxu0 0.0
    %306 = vmatprep.subr.mxu0 0.0
    %307 = vmatpush1.msra.mxu0 0.0
    %308 = vmatprep.subr.mxu0 0.0
    %309 = vmatpush1.msra.mxu0 0.0
    %310 = vmatprep.subr.mxu0 0.0
    %311 = vmatpush1.msra.mxu0 0.0
    %312 = vmatprep.subr.mxu0 0.0
    %313 = vmatpush1.msra.mxu0 0.0
    %314 = vmatprep.subr.mxu0 0.0
    %315 = vmatpush1.msra.mxu0 0.0
    %316 = vmatprep.subr.mxu0 0.0
    %317 = vmatpush1.msra.mxu0 0.0
    %318 = vmatprep.subr.mxu0 0.0
    %319 = vmatpush1.msra.mxu0 0.0
    %320 = vmatprep.subr.mxu0 0.0
    %321 = vmatpush1.msra.mxu0 0.0
    %322 = vmatprep.subr.mxu0 0.0
    %323 = vmatpush1.msra.mxu0 0.0
    %324 = vmatprep.subr.mxu0 0.0
    %325 = vmatpush1.msra.mxu0 0.0
    %326 = vmatprep.mubr.f32.mxu0 0.0
    %327 = vmatmul.mubr.f32.gmra.mrb[0].mxu0 %v260
    %v328 = vpop.f32.mrb[0].mxu0
    %v329 = vadd.f32 %v258, %v328
    %v330 = vpop.f32.mrb[0].mxu0
    %331 = vdwg.mxu0
    %v332 = vtanh.pop %v329
    %v333 = vxor.u32 %v329, 2147483648
    %v334 = vmul.f32 %v333, 1.442695
    %v335 = vpow.pop %v334
    %v336 = vadd.f32 %v335, 1.0
    %v337 = vrcp.pop %v336
    %v338 = vmul.f32 1.0, %v337
    %v339 = vsel %vm123, %v332, %v338
    %340 = vrot.lane.b32.xlu0 %v339, 64
    %v341 = vpop.permute.xlu0 %340
    %v342 = vmul.f32 %v339, %v341
    %344 = vrot.lane.b32.xlu0 %v33, 32
    %v345 = vpop.permute.xlu0 %344
    %v347 = vmul.f32 %v339, %v345
    %349 = vrot.lane.b32.xlu0 %v342, 32
    %v350 = vpop.permute.xlu0 %349
    %v352 = vadd.f32 %v347, %v350
    %v353 = vtanh.pop %v352
    %355 = vrot.lane.b32.xlu0 %v353, 64
    %v356 = vpop.permute.xlu0 %355
    %v358 = vmul.f32 %v339, %v356
    %360 = vrot.lane.b32.xlu0 %v358, 32
    %v361 = vpop.permute.xlu0 %360
    %363 = vrot.lane.b32.xlu0 %v44, 96
    %v364 = vpop.permute.xlu0 %363
    %v366 = vsel %vm124, %v361, 0
    %368 = vmatprep.subr.mxu0 0.0
    %369 = vmatpush1.msra.mxu0 %v36
    %370 = vmatprep.subr.mxu0 0.0
    %371 = vmatpush1.msra.mxu0 %v37
    %372 = vmatprep.subr.mxu0 0.0
    %373 = vmatpush1.msra.mxu0 %v38
    %374 = vmatprep.subr.mxu0 0.0
    %375 = vmatpush1.msra.mxu0 %v39
    %376 = vmatprep.subr.mxu0 0.0
    %377 = vmatpush1.msra.mxu0 0.0
    %378 = vmatprep.subr.mxu0 0.0
    %379 = vmatpush1.msra.mxu0 0.0
    %380 = vmatprep.subr.mxu0 0.0
    %381 = vmatpush1.msra.mxu0 0.0
    %382 = vmatprep.subr.mxu0 0.0
    %383 = vmatpush1.msra.mxu0 0.0
    %384 = vmatprep.subr.mxu0 0.0
    %385 = vmatpush1.msra.mxu0 0.0
    %386 = vmatprep.subr.mxu0 0.0
    %387 = vmatpush1.msra.mxu0 0.0
    %388 = vmatprep.subr.mxu0 0.0
    %389 = vmatpush1.msra.mxu0 0.0
    %390 = vmatprep.subr.mxu0 0.0
    %391 = vmatpush1.msra.mxu0 0.0
    %392 = vmatprep.subr.mxu0 0.0
    %393 = vmatpush1.msra.mxu0 0.0
    %394 = vmatprep.subr.mxu0 0.0
    %395 = vmatpush1.msra.mxu0 0.0
    %396 = vmatprep.subr.mxu0 0.0
    %397 = vmatpush1.msra.mxu0 0.0
    %398 = vmatprep.subr.mxu0 0.0
    %399 = vmatpush1.msra.mxu0 0.0
    %400 = vmatprep.subr.mxu0 0.0
    %401 = vmatpush1.msra.mxu0 0.0
    %402 = vmatprep.subr.mxu0 0.0
    %403 = vmatpush1.msra.mxu0 0.0
    %404 = vmatprep.subr.mxu0 0.0
    %405 = vmatpush1.msra.mxu0 0.0
    %406 = vmatprep.subr.mxu0 0.0
    %407 = vmatpush1.msra.mxu0 0.0
    %408 = vmatprep.subr.mxu0 0.0
    %409 = vmatpush1.msra.mxu0 0.0
    %410 = vmatprep.subr.mxu0 0.0
    %411 = vmatpush1.msra.mxu0 0.0
    %412 = vmatprep.subr.mxu0 0.0
    %413 = vmatpush1.msra.mxu0 0.0
    %414 = vmatprep.subr.mxu0 0.0
    %415 = vmatpush1.msra.mxu0 0.0
    %416 = vmatprep.subr.mxu0 0.0
    %417 = vmatpush1.msra.mxu0 0.0
    %418 = vmatprep.subr.mxu0 0.0
    %419 = vmatpush1.msra.mxu0 0.0
    %420 = vmatprep.subr.mxu0 0.0
    %421 = vmatpush1.msra.mxu0 0.0
    %422 = vmatprep.subr.mxu0 0.0
    %423 = vmatpush1.msra.mxu0 0.0
    %424 = vmatprep.subr.mxu0 0.0
    %425 = vmatpush1.msra.mxu0 0.0
    %426 = vmatprep.subr.mxu0 0.0
    %427 = vmatpush1.msra.mxu0 0.0
    %428 = vmatprep.subr.mxu0 0.0
    %429 = vmatpush1.msra.mxu0 0.0
    %430 = vmatprep.subr.mxu0 0.0
    %431 = vmatpush1.msra.mxu0 0.0
    %432 = vmatprep.mubr.f32.mxu0 0.0
    %433 = vmatmul.mubr.f32.gmra.mrb[0].mxu0 %v366
    %v434 = vpop.f32.mrb[0].mxu0
    %v435 = vadd.f32 %v364, %v434
    %v436 = vpop.f32.mrb[0].mxu0
    %437 = vdwg.mxu0
    %v438 = vmul.f32 %v435, 0.5
    %v439 = vmul.f32 %v438, 1.442695
    %v440 = vpow.pop %v439
    %v441 = vmul.f32 %v32, %v440
    %443 = vrot.lane.b32.xlu0 %v435, 16
    %v444 = vpop.permute.xlu0 %443
    %v446 = vadd.f32 %v441, %v444
    %448 = vrot.lane.b32.xlu0 %v446, 112
    %v449 = vpop.permute.xlu0 %448
    %451 = vrot.lane.b32.xlu0 %v237, 80
    %v452 = vpop.permute.xlu0 %451
    %454 = vrot.lane.b32.xlu0 %v358, 112
    %v455 = vpop.permute.xlu0 %454
    %458 = vrot.lane.b32.xlu0 %v231, 80
    %v459 = vpop.permute.xlu0 %458
    %462 = vrot.lane.b32.xlu0 %v352, 112
    %v463 = vpop.permute.xlu0 %462
    %v465 = vsel %vm45, %v449, %v444
    %v466 = vsel %vm124, %v465, %v444
    %vm467 = vcmask 392192
    %v468 = vsel %vm467, %v466, %v452
    %vm469 = vcmask 654336
    %v470 = vsel %vm469, %v468, %v455
    %vm471 = vcmask 916480
    %v472 = vsel %vm471, %v470, %v459
    %v473 = vsel %vm45, %v459, %v463
    %474 = vst [vmem:[#allocation5] sm:$0xff] %v472
    %475 = vst.msk [vmem:[#allocation5 + $0x8] sm:$0xff] %vm467, %v473
    // Predicated region
    $region22: #{tpu_custom_call.1} parent=1 // pred_check
      _
    $region23: #{tpu_custom_call.1} parent=1 // pred_check_branch
      %477 = sbr.rel (0) target = $region25
    $region24: #{tpu_custom_call.1} parent=1 // pred_region
      %s479 = ssub.s32 256, 256
      %480 = vsyncadd [#allocation4], %s479
      %s482 = sshll.u32 [#allocation5], 4
      %s483 = int_to_ptr.vmem [resolvable:$true] %s482
      %485 = dma.vmem_to_hbm [thread:$0]  %s483, 256, %s4, [#allocation4]
    $region25: #{tpu_custom_call.1} parent=1 // pred_fallthru
      _
    // Predicated region
    $region26: #{tpu_custom_call.1} parent=1 // pred_check
      _
    $region27: #{tpu_custom_call.1} parent=1 // pred_check_branch
      %487 = sbr.rel (0) target = $region29
    $region28: #{tpu_custom_call.1} parent=1 // pred_region
      %488 = dma.done [#allocation4], 256
    $region29: #{tpu_custom_call.1} parent=1 // pred_fallthru
      _
    %489 = vsyncpa [#allocation3], 1
    %490 = vsyncpa [#allocation4], 1

</llo_original>
